<compile_context>
chip_gen: v7x
topology: tpu7x:2x2x1
jax: 0.10.0
libtpu: 0.0.40
codegen_flags: <defaults>
</compile_context>

<pallas_src>
import functools
import math

import numpy as np

import jax
import jax.numpy as jnp
from jax.experimental import pallas as pl
from jax.experimental.pallas import tpu as pltpu


def _convlayer_kernel(xf_ref, w_ref, b_ref, g_ref, beta_ref, m_ref, sa_ref, sb_ref,
                      out_ref, *, n_valid):
    # xf_ref  : (B*Lpad, C)  circularly padded input, batches stacked along rows (sublanes)
    # w_ref   : (K, C, C)    conv weight, w_ref[k] = W_torch[:, :, k].T (right-multiplies rows)
    # b_ref   : (1, C)       conv bias
    # g_ref   : (1, C)       BatchNorm weight (gamma)
    # beta_ref: (1, C)       BatchNorm bias (beta)
    # m_ref   : (Nv, 1)      1.0 on real (batch, t) conv rows, 0.0 on batch-seam junk rows
    # sa_ref  : (B*Lp, Nv)   0/1 selector for the left member of each maxpool window
    # sb_ref  : (B*Lp, Nv)   0/1 selector for the right member of each maxpool window
    # out_ref : (B*Lp, C)    pooled output (reshaped to (B, Lp, C) by the wrapper)
    Npad, C = xf_ref.shape
    K = w_ref.shape[0]
    Nv = Npad - (K - 1)

    xf = xf_ref[...]                                   # single load; stays in vregs

    # ---- Conv1d(kernel_size=3, circular pad already applied): K batch-fused MXU matmuls ----
    acc = jnp.zeros((Nv, C), jnp.float32)
    for k in range(K):                                 # static unroll, K = 3
        acc = acc + jnp.dot(xf[k:k + Nv, :], w_ref[k],
                            preferred_element_type=jnp.float32)
    y = acc + b_ref[...]                               # bias broadcast exactly once

    # ---- BatchNorm1d (training-mode batch stats, biased variance), single pass ----
    m = m_ref[...]
    ym = y * m                                         # zero out batch-seam rows
    s1 = jnp.sum(ym, axis=0, keepdims=True)            # (1, C)
    s2 = jnp.sum(ym * y, axis=0, keepdims=True)        # (1, C)
    inv_n = 1.0 / n_valid
    mean = s1 * inv_n
    var = jnp.maximum(s2 * inv_n - mean * mean, 0.0)
    scale = g_ref[...] * jax.lax.rsqrt(var + 1e-5)
    shift = beta_ref[...] - mean * scale
    yn = y * scale + shift

    # ---- ELU (alpha=1); exp argument clamped so the unselected branch never overflows.
    #      (exp(min(yn,0)) - 1 differs from expm1 by < 1 ulp of 1.0 in absolute terms.) ----
    z = jnp.where(yn > 0, yn, jnp.exp(jnp.minimum(yn, 0.0)) - 1.0)

    # ---- MaxPool1d(k=2, s=2, padding=1): gather the two window members with 0/1 selection
    #      matmuls, one elementwise max, one full-block store. ----
    left = jnp.dot(sa_ref[...], z, preferred_element_type=jnp.float32)
    right = jnp.dot(sb_ref[...], z, preferred_element_type=jnp.float32)
    out_ref[...] = jnp.maximum(left, right).astype(out_ref.dtype)


@jax.jit
def convlayer_forward(x, w, b, gamma, beta):
    """x: (B, L, C) f32; w: (C, C, 3) PyTorch Conv1d layout (O, I, K); b/gamma/beta: (C,)."""
    B, L, C = x.shape
    K = w.shape[-1]
    pad = 2                                            # Conv1d(padding=2, padding_mode='circular')
    assert K == 3 and L >= pad and L % 2 == 0          # even L keeps the pool window math simple
    Lpad = L + 2 * pad                                 # circularly padded length
    Lc = Lpad - (K - 1)                                # conv output length = L + 2
    Lp = Lc // 2 + 1                                   # MaxPool1d(2, 2, padding=1) output length
    Npad = B * Lpad
    Nv = Npad - (K - 1)                                # conv rows incl. 2*(B-1) seam junk rows

    # Layout plumbing outside the kernel: circular pad + stack batches along rows.
    xpad = jnp.concatenate([x[:, L - pad:, :], x, x[:, :pad, :]], axis=1)   # (B, Lpad, C)
    xflat = xpad.reshape(Npad, C).astype(jnp.float32)

    # Conv weight (O, I, K) -> (K, I, O): w_r[k] right-multiplies a (rows, C_in) slab.
    w_r = jnp.transpose(w, (2, 1, 0)).astype(jnp.float32)

    # Compile-time constants: BN row-validity mask + maxpool window-member selectors.
    mask = np.zeros((Nv, 1), np.float32)
    sel_a = np.zeros((B * Lp, Nv), np.float32)
    sel_b = np.zeros((B * Lp, Nv), np.float32)
    for bb in range(B):
        base = bb * Lpad
        mask[base:base + Lc, 0] = 1.0
        for j in range(Lp):
            r = bb * Lp + j
            sel_a[r, base + max(2 * j - 1, 0)] = 1.0   # j==0 edge: duplicate row 0  (== -inf pad)
            sel_b[r, base + min(2 * j, Lc - 1)] = 1.0  # j==Lp-1 edge: duplicate last row

    kernel = functools.partial(_convlayer_kernel, n_valid=float(B * Lc))
    out_flat = pl.pallas_call(
        kernel,
        out_shape=jax.ShapeDtypeStruct((B * Lp, C), jnp.float32),
        in_specs=[pl.BlockSpec(memory_space=pltpu.MemorySpace.VMEM)] * 8,
        out_specs=pl.BlockSpec(memory_space=pltpu.MemorySpace.VMEM),
    )(xflat, w_r, b.reshape(1, C).astype(jnp.float32),
      gamma.reshape(1, C).astype(jnp.float32), beta.reshape(1, C).astype(jnp.float32),
      jnp.asarray(mask), jnp.asarray(sel_a), jnp.asarray(sel_b))
    return out_flat.reshape(B, Lp, C)


def convlayer_reference(x, w, b, gamma, beta):
    """Pure-JAX mirror of the PyTorch forward (NCW internally, like torch)."""
    B, L, C = x.shape
    xc = jnp.transpose(x, (0, 2, 1))                                     # (B, C, L)
    xp = jnp.concatenate([xc[:, :, L - 2:], xc, xc[:, :, :2]], axis=-1)  # circular pad 2
    y = jax.lax.conv_general_dilated(
        xp, w, window_strides=(1,), padding="VALID",
        dimension_numbers=("NCH", "OIH", "NCH"))
    y = y + b[None, :, None]
    mean = jnp.mean(y, axis=(0, 2), keepdims=True)
    var = jnp.mean((y - mean) ** 2, axis=(0, 2), keepdims=True)
    y = (y - mean) * jax.lax.rsqrt(var + 1e-5) * gamma[None, :, None] + beta[None, :, None]
    y = jnp.where(y > 0, y, jnp.expm1(y))                                # ELU(alpha=1)
    Lc = y.shape[-1]
    Lp = Lc // 2 + 1
    yp = jnp.pad(y, ((0, 0), (0, 0), (1, 1)), constant_values=-jnp.inf)
    y = jnp.maximum(yp[:, :, 0:2 * Lp:2], yp[:, :, 1:2 * Lp:2])          # MaxPool1d(2, 2, pad=1)
    return jnp.transpose(y, (0, 2, 1))                                   # (B, Lp, C)


if __name__ == "__main__":
    B, L, C = 2, 16, 8          # x: (batch, seq_len, c_in)  ->  output: (2, 10, 8)
    key = jax.random.PRNGKey(0)
    k1, k2, k3 = jax.random.split(key, 3)

    # Deterministic parameter init (shapes from ConvLayer.__init__; PyTorch-default-like scales).
    fan_in = C * 3
    bound = 1.0 / math.sqrt(fan_in)
    w = jax.random.uniform(k1, (C, C, 3), jnp.float32, -bound, bound)    # Conv1d weight (O, I, K)
    b = jax.random.uniform(k2, (C,), jnp.float32, -bound, bound)         # Conv1d bias
    gamma = jnp.ones((C,), jnp.float32)                                  # BatchNorm1d weight
    beta = jnp.zeros((C,), jnp.float32)                                  # BatchNorm1d bias

    x = jax.random.normal(k3, (B, L, C), jnp.float32)

    out = jax.block_until_ready(convlayer_forward(x, w, b, gamma, beta))

    ref = convlayer_reference(x, w, b, gamma, beta)
    assert out.shape == (B, (L + 2) // 2 + 1, C), out.shape
    assert jnp.allclose(out, ref, atol=2e-3, rtol=2e-3), float(jnp.max(jnp.abs(out - ref)))

    print("KERNEL_OK")
</pallas_src>

<mosaic_0001>
module attributes {stable_mosaic.version = 11 : i64} {
  func.func @_convlayer_kernel(%arg0: memref<40x8xf32, #tpu.memory_space<vmem>>, %arg1: memref<3x8x8xf32, #tpu.memory_space<vmem>>, %arg2: memref<1x8xf32, #tpu.memory_space<vmem>>, %arg3: memref<1x8xf32, #tpu.memory_space<vmem>>, %arg4: memref<1x8xf32, #tpu.memory_space<vmem>>, %arg5: memref<38x1xf32, #tpu.memory_space<vmem>>, %arg6: memref<20x38xf32, #tpu.memory_space<vmem>>, %arg7: memref<20x38xf32, #tpu.memory_space<vmem>>, %arg8: memref<20x8xf32, #tpu.memory_space<vmem>>) attributes {dimension_semantics = [], scalar_prefetch = 0 : i64, scratch_operands = 0 : i64, tpu.core_type = #tpu.core_type<tc>} {
    %c0 = arith.constant 0 : index
    %c0_0 = arith.constant 0 : index
    %0 = vector.load %arg0[%c0, %c0_0] : memref<40x8xf32, #tpu.memory_space<vmem>>, vector<40x8xf32>
    %cst = arith.constant 0.000000e+00 : f32
    %1 = vector.broadcast %cst : f32 to vector<38x8xf32>
    %2 = vector.extract_strided_slice %0 {offsets = [0, 0], sizes = [38, 8], strides = [1, 1]} : vector<40x8xf32> to vector<38x8xf32>
    %c0_1 = arith.constant 0 : index
    %c0_2 = arith.constant 0 : index
    %c0_3 = arith.constant 0 : index
    %3 = vector.load %arg1[%c0_1, %c0_2, %c0_3] : memref<3x8x8xf32, #tpu.memory_space<vmem>>, vector<1x8x8xf32>
    %4 = vector.shape_cast %3 : vector<1x8x8xf32> to vector<8x8xf32>
    %cst_4 = arith.constant dense<0.000000e+00> : vector<38x8xf32>
    %5 = tpu.matmul %2, %4, %cst_4 {dimension_numbers = #tpu.dot_dimension_numbers<[1], [0], [0], [1], [0, 0, 1, 1], [], []>} : vector<38x8xf32>, vector<8x8xf32>, vector<38x8xf32> -> vector<38x8xf32>
    %6 = arith.addf %1, %5 : vector<38x8xf32>
    %7 = vector.extract_strided_slice %0 {offsets = [1, 0], sizes = [38, 8], strides = [1, 1]} : vector<40x8xf32> to vector<38x8xf32>
    %c1 = arith.constant 1 : index
    %c0_5 = arith.constant 0 : index
    %c0_6 = arith.constant 0 : index
    %8 = vector.load %arg1[%c1, %c0_5, %c0_6] : memref<3x8x8xf32, #tpu.memory_space<vmem>>, vector<1x8x8xf32>
    %9 = vector.shape_cast %8 : vector<1x8x8xf32> to vector<8x8xf32>
    %cst_7 = arith.constant dense<0.000000e+00> : vector<38x8xf32>
    %10 = tpu.matmul %7, %9, %cst_7 {dimension_numbers = #tpu.dot_dimension_numbers<[1], [0], [0], [1], [0, 0, 1, 1], [], []>} : vector<38x8xf32>, vector<8x8xf32>, vector<38x8xf32> -> vector<38x8xf32>
    %11 = arith.addf %6, %10 : vector<38x8xf32>
    %12 = vector.extract_strided_slice %0 {offsets = [2, 0], sizes = [38, 8], strides = [1, 1]} : vector<40x8xf32> to vector<38x8xf32>
    %c2 = arith.constant 2 : index
    %c0_8 = arith.constant 0 : index
    %c0_9 = arith.constant 0 : index
    %13 = vector.load %arg1[%c2, %c0_8, %c0_9] : memref<3x8x8xf32, #tpu.memory_space<vmem>>, vector<1x8x8xf32>
    %14 = vector.shape_cast %13 : vector<1x8x8xf32> to vector<8x8xf32>
    %cst_10 = arith.constant dense<0.000000e+00> : vector<38x8xf32>
    %15 = tpu.matmul %12, %14, %cst_10 {dimension_numbers = #tpu.dot_dimension_numbers<[1], [0], [0], [1], [0, 0, 1, 1], [], []>} : vector<38x8xf32>, vector<8x8xf32>, vector<38x8xf32> -> vector<38x8xf32>
    %16 = arith.addf %11, %15 : vector<38x8xf32>
    %c0_11 = arith.constant 0 : index
    %c0_12 = arith.constant 0 : index
    %17 = vector.load %arg2[%c0_11, %c0_12] : memref<1x8xf32, #tpu.memory_space<vmem>>, vector<1x8xf32>
    %18 = vector.broadcast %17 : vector<1x8xf32> to vector<38x8xf32>
    %19 = arith.addf %16, %18 : vector<38x8xf32>
    %c0_13 = arith.constant 0 : index
    %c0_14 = arith.constant 0 : index
    %20 = vector.load %arg5[%c0_13, %c0_14] : memref<38x1xf32, #tpu.memory_space<vmem>>, vector<38x1xf32>
    %21 = vector.broadcast %20 : vector<38x1xf32> to vector<38x8xf32>
    %22 = arith.mulf %19, %21 : vector<38x8xf32>
    %cst_15 = arith.constant dense<0.000000e+00> : vector<8xf32>
    %23 = vector.multi_reduction <add>, %22, %cst_15 [0] : vector<38x8xf32> to vector<8xf32>
    %24 = vector.shape_cast %23 : vector<8xf32> to vector<1x8xf32>
    %25 = arith.mulf %22, %19 : vector<38x8xf32>
    %cst_16 = arith.constant dense<0.000000e+00> : vector<8xf32>
    %26 = vector.multi_reduction <add>, %25, %cst_16 [0] : vector<38x8xf32> to vector<8xf32>
    %27 = vector.shape_cast %26 : vector<8xf32> to vector<1x8xf32>
    %cst_17 = arith.constant 0.027777778 : f32
    %28 = vector.broadcast %cst_17 : f32 to vector<1x8xf32>
    %29 = arith.mulf %24, %28 : vector<1x8xf32>
    %cst_18 = arith.constant 0.027777778 : f32
    %30 = vector.broadcast %cst_18 : f32 to vector<1x8xf32>
    %31 = arith.mulf %27, %30 : vector<1x8xf32>
    %32 = arith.mulf %29, %29 : vector<1x8xf32>
    %33 = arith.subf %31, %32 : vector<1x8xf32>
    %cst_19 = arith.constant 0.000000e+00 : f32
    %34 = vector.broadcast %cst_19 : f32 to vector<1x8xf32>
    %35 = arith.maximumf %33, %34 : vector<1x8xf32>
    %c0_20 = arith.constant 0 : index
    %c0_21 = arith.constant 0 : index
    %36 = vector.load %arg3[%c0_20, %c0_21] : memref<1x8xf32, #tpu.memory_space<vmem>>, vector<1x8xf32>
    %cst_22 = arith.constant 9.99999974E-6 : f32
    %37 = vector.broadcast %cst_22 : f32 to vector<1x8xf32>
    %38 = arith.addf %35, %37 : vector<1x8xf32>
    %39 = math.rsqrt %38 : vector<1x8xf32>
    %40 = arith.mulf %36, %39 : vector<1x8xf32>
    %c0_23 = arith.constant 0 : index
    %c0_24 = arith.constant 0 : index
    %41 = vector.load %arg4[%c0_23, %c0_24] : memref<1x8xf32, #tpu.memory_space<vmem>>, vector<1x8xf32>
    %42 = arith.mulf %29, %40 : vector<1x8xf32>
    %43 = arith.subf %41, %42 : vector<1x8xf32>
    %44 = vector.broadcast %40 : vector<1x8xf32> to vector<38x8xf32>
    %45 = arith.mulf %19, %44 : vector<38x8xf32>
    %46 = vector.broadcast %43 : vector<1x8xf32> to vector<38x8xf32>
    %47 = arith.addf %45, %46 : vector<38x8xf32>
    %cst_25 = arith.constant 0.000000e+00 : f32
    %48 = vector.broadcast %cst_25 : f32 to vector<38x8xf32>
    %49 = arith.cmpf ogt, %47, %48 : vector<38x8xf32>
    %cst_26 = arith.constant 0.000000e+00 : f32
    %50 = vector.broadcast %cst_26 : f32 to vector<38x8xf32>
    %51 = arith.minimumf %47, %50 : vector<38x8xf32>
    %52 = math.exp %51 : vector<38x8xf32>
    %cst_27 = arith.constant 1.000000e+00 : f32
    %53 = vector.broadcast %cst_27 : f32 to vector<38x8xf32>
    %54 = arith.subf %52, %53 : vector<38x8xf32>
    %55 = arith.select %49, %47, %54 : vector<38x8xi1>, vector<38x8xf32>
    %c0_28 = arith.constant 0 : index
    %c0_29 = arith.constant 0 : index
    %56 = vector.load %arg6[%c0_28, %c0_29] : memref<20x38xf32, #tpu.memory_space<vmem>>, vector<20x38xf32>
    %cst_30 = arith.constant dense<0.000000e+00> : vector<20x8xf32>
    %57 = tpu.matmul %56, %55, %cst_30 {dimension_numbers = #tpu.dot_dimension_numbers<[1], [0], [0], [1], [0, 0, 1, 1], [], []>} : vector<20x38xf32>, vector<38x8xf32>, vector<20x8xf32> -> vector<20x8xf32>
    %c0_31 = arith.constant 0 : index
    %c0_32 = arith.constant 0 : index
    %58 = vector.load %arg7[%c0_31, %c0_32] : memref<20x38xf32, #tpu.memory_space<vmem>>, vector<20x38xf32>
    %cst_33 = arith.constant dense<0.000000e+00> : vector<20x8xf32>
    %59 = tpu.matmul %58, %55, %cst_33 {dimension_numbers = #tpu.dot_dimension_numbers<[1], [0], [0], [1], [0, 0, 1, 1], [], []>} : vector<20x38xf32>, vector<38x8xf32>, vector<20x8xf32> -> vector<20x8xf32>
    %60 = arith.maximumf %57, %59 : vector<20x8xf32>
    %c0_34 = arith.constant 0 : index
    %c0_35 = arith.constant 0 : index
    %61 = vector.load %arg8[%c0_34, %c0_35] : memref<20x8xf32, #tpu.memory_space<vmem>>, vector<20x8xf32>
    tpu.vector_store %arg8[%c0_34, %c0_35], %60 {strides = array<i32>} : memref<20x8xf32, #tpu.memory_space<vmem>>, vector<20x8xf32>,
    return
  }
}

</mosaic_0001>

<llo_original>
// kernel: convlayer_forward.1
$region0: #{convlayer_forward.1}
  #allocation0 [shape = 'u32[]', space=smem, size = 0x4, offset = 0x4, fixed_abs, tag = 'smem constant byte address 0x4 - core index']
  #allocation1 [shape = 'u32[144,128]{1,0:T(1,128)}', space=vmem, size = 0x12000, scoped, tag = 'internal scratch']
  %s0 = inlined_call_operand.vmem [shape: f32[40,8], index: 0, kind: input, shape index: {}]
  %s1 = inlined_call_operand.vmem [shape: f32[3,8,8], index: 1, kind: input, shape index: {}]
  %s2 = inlined_call_operand.vmem [shape: f32[1,8], index: 2, kind: input, shape index: {}]
  %s3 = inlined_call_operand.vmem [shape: f32[1,8], index: 3, kind: input, shape index: {}]
  %s4 = inlined_call_operand.vmem [shape: f32[1,8], index: 4, kind: input, shape index: {}]
  %s5 = inlined_call_operand.vmem [shape: f32[38,1], index: 5, kind: input, shape index: {}]
  %s6 = inlined_call_operand.vmem [shape: f32[20,38], index: 6, kind: input, shape index: {}]
  %s7 = inlined_call_operand.vmem [shape: f32[20,38], index: 7, kind: input, shape index: {}]
  %s8 = inlined_call_operand.vmem [shape: f32[20,8], index: 8, kind: output, shape index: {}]
  %s9 = sld [smem:[#allocation0]]
  $region42: #{convlayer_forward.1} parent=0
    _
  %s11 = ssub.s32 1, %s9
  %s12 = scalar_select 0, %s11, %s9
  // Predicated region
  $region2: #{convlayer_forward.1} parent=0 // pred_check
    _
  $region3: #{convlayer_forward.1} parent=0 // pred_check_branch
    %14 = sbr.rel (0) target = $region5
  $region4: #{convlayer_forward.1} parent=0 // pred_region
    _
  $region5: #{convlayer_forward.1} parent=0 // pred_fallthru
    _
  // Predicated region
  $region6: #{convlayer_forward.1} parent=0 // pred_check
    _
  $region7: #{convlayer_forward.1} parent=0 // pred_check_branch
    %16 = sbr.rel (0) target = $region9
  $region8: #{convlayer_forward.1} parent=0 // pred_region
    _
  $region9: #{convlayer_forward.1} parent=0 // pred_fallthru
    _
  // Predicated region
  $region10: #{convlayer_forward.1} parent=0 // pred_check
    _
  $region11: #{convlayer_forward.1} parent=0 // pred_check_branch
    %18 = sbr.rel (0) target = $region13
  $region12: #{convlayer_forward.1} parent=0 // pred_region
    _
  $region13: #{convlayer_forward.1} parent=0 // pred_fallthru
    _
  // Predicated region
  $region14: #{convlayer_forward.1} parent=0 // pred_check
    _
  $region15: #{convlayer_forward.1} parent=0 // pred_check_branch
    %20 = sbr.rel (0) target = $region17
  $region16: #{convlayer_forward.1} parent=0 // pred_region
    _
  $region17: #{convlayer_forward.1} parent=0 // pred_fallthru
    _
  // Predicated region
  $region18: #{convlayer_forward.1} parent=0 // pred_check
    _
  $region19: #{convlayer_forward.1} parent=0 // pred_check_branch
    %22 = sbr.rel (0) target = $region21
  $region20: #{convlayer_forward.1} parent=0 // pred_region
    _
  $region21: #{convlayer_forward.1} parent=0 // pred_fallthru
    _
  // Predicated region
  $region22: #{convlayer_forward.1} parent=0 // pred_check
    _
  $region23: #{convlayer_forward.1} parent=0 // pred_check_branch
    %24 = sbr.rel (0) target = $region25
  $region24: #{convlayer_forward.1} parent=0 // pred_region
    _
  $region25: #{convlayer_forward.1} parent=0 // pred_fallthru
    _
  // Predicated region
  $region26: #{convlayer_forward.1} parent=0 // pred_check
    _
  $region27: #{convlayer_forward.1} parent=0 // pred_check_branch
    %26 = sbr.rel (0) target = $region29
  $region28: #{convlayer_forward.1} parent=0 // pred_region
    _
  $region29: #{convlayer_forward.1} parent=0 // pred_fallthru
    _
  // Predicated region
  $region30: #{convlayer_forward.1} parent=0 // pred_check
    _
  $region31: #{convlayer_forward.1} parent=0 // pred_check_branch
    %28 = sbr.rel (0) target = $region33
  $region32: #{convlayer_forward.1} parent=0 // pred_region
    _
  $region33: #{convlayer_forward.1} parent=0 // pred_fallthru
    _
  %v29 = vld [vmem:[%s0] sm:$0xff]
  %v30 = vld [vmem:[%s0 + $0x8] sm:$0xff]
  %v31 = vld [vmem:[%s0 + $0x10] sm:$0xff]
  %v32 = vld [vmem:[%s0 + $0x18] sm:$0xff]
  %v33 = vld [vmem:[%s0 + $0x20] sm:$0xff]
  %v34 = vld [vmem:[%s1] sm:$0xff]
  %s35 = scalar_lea.vmem %s1, 8
  %v36 = vld [vmem:[%s35] sm:$0xff]
  %vm42 = vcmask 1046528
  %v43 = vrot.slane %v29, 1
  %v44 = vrot.slane %v30, 1
  %v45 = vsel %vm42, %v43, %v44
  %v46 = vrot.slane %v31, 1
  %v47 = vsel %vm42, %v44, %v46
  %v48 = vrot.slane %v32, 1
  %v49 = vsel %vm42, %v46, %v48
  %v50 = vrot.slane %v33, 1
  %v51 = vsel %vm42, %v48, %v50
  %vm52 = vcmask 64512
  %v53 = vsel %vm52, %v45, 0
  %v55 = vsel %vm52, %v47, 0
  %v57 = vsel %vm52, %v49, 0
  %v59 = vsel %vm52, %v51, 0
  %v61 = vsel %vm52, %v50, 0
  %63 = vmatprep.subr.mxu0 0.0
  %64 = vmatpush1.msra.mxu0 %v36
  %65 = vmatprep.subr.mxu0 0.0
  %66 = vmatpush1.msra.mxu0 0.0
  %67 = vmatprep.subr.mxu0 0.0
  %68 = vmatpush1.msra.mxu0 0.0
  %69 = vmatprep.subr.mxu0 0.0
  %70 = vmatpush1.msra.mxu0 0.0
  %71 = vmatprep.subr.mxu0 0.0
  %72 = vmatpush1.msra.mxu0 0.0
  %73 = vmatprep.subr.mxu0 0.0
  %74 = vmatpush1.msra.mxu0 0.0
  %75 = vmatprep.subr.mxu0 0.0
  %76 = vmatpush1.msra.mxu0 0.0
  %77 = vmatprep.subr.mxu0 0.0
  %78 = vmatpush1.msra.mxu0 0.0
  %79 = vmatprep.subr.mxu0 0.0
  %80 = vmatpush1.msra.mxu0 0.0
  %81 = vmatprep.subr.mxu0 0.0
  %82 = vmatpush1.msra.mxu0 0.0
  %83 = vmatprep.subr.mxu0 0.0
  %84 = vmatpush1.msra.mxu0 0.0
  %85 = vmatprep.subr.mxu0 0.0
  %86 = vmatpush1.msra.mxu0 0.0
  %87 = vmatprep.subr.mxu0 0.0
  %88 = vmatpush1.msra.mxu0 0.0
  %89 = vmatprep.subr.mxu0 0.0
  %90 = vmatpush1.msra.mxu0 0.0
  %91 = vmatprep.subr.mxu0 0.0
  %92 = vmatpush1.msra.mxu0 0.0
  %93 = vmatprep.subr.mxu0 0.0
  %94 = vmatpush1.msra.mxu0 0.0
  %95 = vmatprep.subr.mxu0 0.0
  %96 = vmatpush1.msra.mxu0 0.0
  %97 = vmatprep.subr.mxu0 0.0
  %98 = vmatpush1.msra.mxu0 0.0
  %99 = vmatprep.subr.mxu0 0.0
  %100 = vmatpush1.msra.mxu0 0.0
  %101 = vmatprep.subr.mxu0 0.0
  %102 = vmatpush1.msra.mxu0 0.0
  %103 = vmatprep.subr.mxu0 0.0
  %104 = vmatpush1.msra.mxu0 0.0
  %105 = vmatprep.subr.mxu0 0.0
  %106 = vmatpush1.msra.mxu0 0.0
  %107 = vmatprep.subr.mxu0 0.0
  %108 = vmatpush1.msra.mxu0 0.0
  %109 = vmatprep.subr.mxu0 0.0
  %110 = vmatpush1.msra.mxu0 0.0
  %111 = vmatprep.subr.mxu0 0.0
  %112 = vmatpush1.msra.mxu0 0.0
  %113 = vmatprep.subr.mxu0 0.0
  %114 = vmatpush1.msra.mxu0 0.0
  %115 = vmatprep.subr.mxu0 0.0
  %116 = vmatpush1.msra.mxu0 0.0
  %117 = vmatprep.subr.mxu0 0.0
  %118 = vmatpush1.msra.mxu0 0.0
  %119 = vmatprep.subr.mxu0 0.0
  %120 = vmatpush1.msra.mxu0 0.0
  %121 = vmatprep.subr.mxu0 0.0
  %122 = vmatpush1.msra.mxu0 0.0
  %123 = vmatprep.subr.mxu0 0.0
  %124 = vmatpush1.msra.mxu0 0.0
  %125 = vmatprep.subr.mxu0 0.0
  %126 = vmatpush1.msra.mxu0 0.0
  %127 = vmatprep.mubr.f32.mxu0 0.0
  %128 = vmatmul.mubr.f32.gmra.mrb[0].mxu0 %v53
  %v129 = vpop.f32.mrb[0].mxu0
  %v130 = vadd.f32 0.0, %v129
  %v131 = vpop.f32.mrb[0].mxu0
  %132 = vmatprep.mubr.f32.mxu0 0.0
  %133 = vmatmul.mubr.f32.gmra.mrb[0].mxu0 %v55
  %v134 = vpop.f32.mrb[0].mxu0
  %v135 = vadd.f32 0.0, %v134
  %v136 = vpop.f32.mrb[0].mxu0
  %137 = vmatprep.mubr.f32.mxu0 0.0
  %138 = vmatmul.mubr.f32.gmra.mrb[0].mxu0 %v57
  %v139 = vpop.f32.mrb[0].mxu0
  %v140 = vadd.f32 0.0, %v139
  %v141 = vpop.f32.mrb[0].mxu0
  %142 = vmatprep.mubr.f32.mxu0 0.0
  %143 = vmatmul.mubr.f32.gmra.mrb[0].mxu0 %v59
  %v144 = vpop.f32.mrb[0].mxu0
  %v145 = vadd.f32 0.0, %v144
  %v146 = vpop.f32.mrb[0].mxu0
  %147 = vmatprep.mubr.f32.mxu0 0.0
  %148 = vmatmul.mubr.f32.gmra.mrb[0].mxu0 %v61
  %v149 = vpop.f32.mrb[0].mxu0
  %v150 = vadd.f32 0.0, %v149
  %v151 = vpop.f32.mrb[0].mxu0
  %152 = vdwg.mxu0
  %v153 = vsel %vm52, %v29, 0
  %v155 = vsel %vm52, %v30, 0
  %v157 = vsel %vm52, %v31, 0
  %v159 = vsel %vm52, %v32, 0
  %v161 = vsel %vm52, %v33, 0
  %163 = vmatprep.subr.mxu0 0.0
  %164 = vmatpush1.msra.mxu0 %v34
  %165 = vmatprep.subr.mxu0 0.0
  %166 = vmatpush1.msra.mxu0 0.0
  %167 = vmatprep.subr.mxu0 0.0
  %168 = vmatpush1.msra.mxu0 0.0
  %169 = vmatprep.subr.mxu0 0.0
  %170 = vmatpush1.msra.mxu0 0.0
  %171 = vmatprep.subr.mxu0 0.0
  %172 = vmatpush1.msra.mxu0 0.0
  %173 = vmatprep.subr.mxu0 0.0
  %174 = vmatpush1.msra.mxu0 0.0
  %175 = vmatprep.subr.mxu0 0.0
  %176 = vmatpush1.msra.mxu0 0.0
  %177 = vmatprep.subr.mxu0 0.0
  %178 = vmatpush1.msra.mxu0 0.0
  %179 = vmatprep.subr.mxu0 0.0
  %180 = vmatpush1.msra.mxu0 0.0
  %181 = vmatprep.subr.mxu0 0.0
  %182 = vmatpush1.msra.mxu0 0.0
  %183 = vmatprep.subr.mxu0 0.0
  %184 = vmatpush1.msra.mxu0 0.0
  %185 = vmatprep.subr.mxu0 0.0
  %186 = vmatpush1.msra.mxu0 0.0
  %187 = vmatprep.subr.mxu0 0.0
  %188 = vmatpush1.msra.mxu0 0.0
  %189 = vmatprep.subr.mxu0 0.0
  %190 = vmatpush1.msra.mxu0 0.0
  %191 = vmatprep.subr.mxu0 0.0
  %192 = vmatpush1.msra.mxu0 0.0
  %193 = vmatprep.subr.mxu0 0.0
  %194 = vmatpush1.msra.mxu0 0.0
  %195 = vmatprep.subr.mxu0 0.0
  %196 = vmatpush1.msra.mxu0 0.0
  %197 = vmatprep.subr.mxu0 0.0
  %198 = vmatpush1.msra.mxu0 0.0
  %199 = vmatprep.subr.mxu0 0.0
  %200 = vmatpush1.msra.mxu0 0.0
  %201 = vmatprep.subr.mxu0 0.0
  %202 = vmatpush1.msra.mxu0 0.0
  %203 = vmatprep.subr.mxu0 0.0
  %204 = vmatpush1.msra.mxu0 0.0
  %205 = vmatprep.subr.mxu0 0.0
  %206 = vmatpush1.msra.mxu0 0.0
  %207 = vmatprep.subr.mxu0 0.0
  %208 = vmatpush1.msra.mxu0 0.0
  %209 = vmatprep.subr.mxu0 0.0
  %210 = vmatpush1.msra.mxu0 0.0
  %211 = vmatprep.subr.mxu0 0.0
  %212 = vmatpush1.msra.mxu0 0.0
  %213 = vmatprep.subr.mxu0 0.0
  %214 = vmatpush1.msra.mxu0 0.0
  %215 = vmatprep.subr.mxu0 0.0
  %216 = vmatpush1.msra.mxu0 0.0
  %217 = vmatprep.subr.mxu0 0.0
  %218 = vmatpush1.msra.mxu0 0.0
  %219 = vmatprep.subr.mxu0 0.0
  %220 = vmatpush1.msra.mxu0 0.0
  %221 = vmatprep.subr.mxu0 0.0
  %222 = vmatpush1.msra.mxu0 0.0
  %223 = vmatprep.subr.mxu0 0.0
  %224 = vmatpush1.msra.mxu0 0.0
  %225 = vmatprep.subr.mxu0 0.0
  %226 = vmatpush1.msra.mxu0 0.0
  %227 = vmatprep.mubr.f32.mxu0 0.0
  %228 = vmatmul.mubr.f32.gmra.mrb[0].mxu0 %v153
  %v229 = vpop.f32.mrb[0].mxu0
  %v230 = vadd.f32 %v130, %v229
  %v231 = vpop.f32.mrb[0].mxu0
  %232 = vmatprep.mubr.f32.mxu0 0.0
  %233 = vmatmul.mubr.f32.gmra.mrb[0].mxu0 %v155
  %v234 = vpop.f32.mrb[0].mxu0
  %v235 = vadd.f32 %v135, %v234
  %v236 = vpop.f32.mrb[0].mxu0
  %237 = vmatprep.mubr.f32.mxu0 0.0
  %238 = vmatmul.mubr.f32.gmra.mrb[0].mxu0 %v157
  %v239 = vpop.f32.mrb[0].mxu0
  %v240 = vadd.f32 %v140, %v239
  %v241 = vpop.f32.mrb[0].mxu0
  %242 = vmatprep.mubr.f32.mxu0 0.0
  %243 = vmatmul.mubr.f32.gmra.mrb[0].mxu0 %v159
  %v244 = vpop.f32.mrb[0].mxu0
  %v245 = vadd.f32 %v145, %v244
  %v246 = vpop.f32.mrb[0].mxu0
  %247 = vmatprep.mubr.f32.mxu0 0.0
  %248 = vmatmul.mubr.f32.gmra.mrb[0].mxu0 %v161
  %v249 = vpop.f32.mrb[0].mxu0
  %v250 = vadd.f32 %v150, %v249
  %v251 = vpop.f32.mrb[0].mxu0
  %252 = vdwg.mxu0
  %s253 = scalar_lea.vmem %s1, 16
  %v254 = vld [vmem:[%s253] sm:$0xff]
  %vm255 = vcmask 1045504
  %v256 = vrot.slane %v29, 2
  %v257 = vrot.slane %v30, 2
  %v258 = vsel %vm255, %v256, %v257
  %v259 = vrot.slane %v31, 2
  %v260 = vsel %vm255, %v257, %v259
  %v261 = vrot.slane %v32, 2
  %v262 = vsel %vm255, %v259, %v261
  %v263 = vrot.slane %v33, 2
  %v264 = vsel %vm255, %v261, %v263
  %v265 = vsel %vm52, %v258, 0
  %v267 = vsel %vm52, %v260, 0
  %v269 = vsel %vm52, %v262, 0
  %v271 = vsel %vm52, %v264, 0
  %v273 = vsel %vm52, %v263, 0
  %275 = vmatprep.subr.mxu0 0.0
  %276 = vmatpush1.msra.mxu0 %v254
  %277 = vmatprep.subr.mxu0 0.0
  %278 = vmatpush1.msra.mxu0 0.0
  %279 = vmatprep.subr.mxu0 0.0
  %280 = vmatpush1.msra.mxu0 0.0
  %281 = vmatprep.subr.mxu0 0.0
  %282 = vmatpush1.msra.mxu0 0.0
  %283 = vmatprep.subr.mxu0 0.0
  %284 = vmatpush1.msra.mxu0 0.0
  %285 = vmatprep.subr.mxu0 0.0
  %286 = vmatpush1.msra.mxu0 0.0
  %287 = vmatprep.subr.mxu0 0.0
  %288 = vmatpush1.msra.mxu0 0.0
  %289 = vmatprep.subr.mxu0 0.0
  %290 = vmatpush1.msra.mxu0 0.0
  %291 = vmatprep.subr.mxu0 0.0
  %292 = vmatpush1.msra.mxu0 0.0
  %293 = vmatprep.subr.mxu0 0.0
  %294 = vmatpush1.msra.mxu0 0.0
  %295 = vmatprep.subr.mxu0 0.0
  %296 = vmatpush1.msra.mxu0 0.0
  %297 = vmatprep.subr.mxu0 0.0
  %298 = vmatpush1.msra.mxu0 0.0
  %299 = vmatprep.subr.mxu0 0.0
  %300 = vmatpush1.msra.mxu0 0.0
  %301 = vmatprep.subr.mxu0 0.0
  %302 = vmatpush1.msra.mxu0 0.0
  %303 = vmatprep.subr.mxu0 0.0
  %304 = vmatpush1.msra.mxu0 0.0
  %305 = vmatprep.subr.mxu0 0.0
  %306 = vmatpush1.msra.mxu0 0.0
  %307 = vmatprep.subr.mxu0 0.0
  %308 = vmatpush1.msra.mxu0 0.0
  %309 = vmatprep.subr.mxu0 0.0
  %310 = vmatpush1.msra.mxu0 0.0
  %311 = vmatprep.subr.mxu0 0.0
  %312 = vmatpush1.msra.mxu0 0.0
  %313 = vmatprep.subr.mxu0 0.0
  %314 = vmatpush1.msra.mxu0 0.0
  %315 = vmatprep.subr.mxu0 0.0
  %316 = vmatpush1.msra.mxu0 0.0
  %317 = vmatprep.subr.mxu0 0.0
  %318 = vmatpush1.msra.mxu0 0.0
  %319 = vmatprep.subr.mxu0 0.0
  %320 = vmatpush1.msra.mxu0 0.0
  %321 = vmatprep.subr.mxu0 0.0
  %322 = vmatpush1.msra.mxu0 0.0
  %323 = vmatprep.subr.mxu0 0.0
  %324 = vmatpush1.msra.mxu0 0.0
  %325 = vmatprep.subr.mxu0 0.0
  %326 = vmatpush1.msra.mxu0 0.0
  %327 = vmatprep.subr.mxu0 0.0
  %328 = vmatpush1.msra.mxu0 0.0
  %329 = vmatprep.subr.mxu0 0.0
  %330 = vmatpush1.msra.mxu0 0.0
  %331 = vmatprep.subr.mxu0 0.0
  %332 = vmatpush1.msra.mxu0 0.0
  %333 = vmatprep.subr.mxu0 0.0
  %334 = vmatpush1.msra.mxu0 0.0
  %335 = vmatprep.subr.mxu0 0.0
  %336 = vmatpush1.msra.mxu0 0.0
  %337 = vmatprep.subr.mxu0 0.0
  %338 = vmatpush1.msra.mxu0 0.0
  %339 = vmatprep.mubr.f32.mxu0 0.0
  %340 = vmatmul.mubr.f32.gmra.mrb[0].mxu0 %v265
  %v341 = vpop.f32.mrb[0].mxu0
  %v342 = vadd.f32 0.0, %v341
  %v343 = vpop.f32.mrb[0].mxu0
  %344 = vmatprep.mubr.f32.mxu0 0.0
  %345 = vmatmul.mubr.f32.gmra.mrb[0].mxu0 %v267
  %v346 = vpop.f32.mrb[0].mxu0
  %v347 = vadd.f32 0.0, %v346
  %v348 = vpop.f32.mrb[0].mxu0
  %349 = vmatprep.mubr.f32.mxu0 0.0
  %350 = vmatmul.mubr.f32.gmra.mrb[0].mxu0 %v269
  %v351 = vpop.f32.mrb[0].mxu0
  %v352 = vadd.f32 0.0, %v351
  %v353 = vpop.f32.mrb[0].mxu0
  %354 = vmatprep.mubr.f32.mxu0 0.0
  %355 = vmatmul.mubr.f32.gmra.mrb[0].mxu0 %v271
  %v356 = vpop.f32.mrb[0].mxu0
  %v357 = vadd.f32 0.0, %v356
  %v358 = vpop.f32.mrb[0].mxu0
  %359 = vmatprep.mubr.f32.mxu0 0.0
  %360 = vmatmul.mubr.f32.gmra.mrb[0].mxu0 %v273
  %v361 = vpop.f32.mrb[0].mxu0
  %v362 = vadd.f32 0.0, %v361
  %v363 = vpop.f32.mrb[0].mxu0
  %364 = vdwg.mxu0
  %v365 = vadd.f32 %v230, %v342
  %v366 = vadd.f32 %v235, %v347
  %v367 = vadd.f32 %v240, %v352
  %v368 = vadd.f32 %v245, %v357
  %v369 = vadd.f32 %v250, %v362
  %v370 = vld [vmem:[%s2] sm:$0x1]
  %v372 = vlaneseq
  %v373 = vshrl.u32 %v372, 7
  %v374 = vsub.s32 0, %v373
  %v375 = vrot.slane %v370, %v374
  %v377 = vadd.f32 %v365, %v375
  %v378 = vadd.f32 %v366, %v375
  %v379 = vadd.f32 %v367, %v375
  %v380 = vadd.f32 %v368, %v375
  %v381 = vadd.f32 %v369, %v375
  %v382 = vld [vmem:[%s5] sm:$0xff]
  %v383 = vld [vmem:[%s5 + $0x8] sm:$0xff]
  %v384 = vld [vmem:[%s5 + $0x10] sm:$0xff]
  %v385 = vld [vmem:[%s5 + $0x18] sm:$0xff]
  %v386 = vld [vmem:[%s5 + $0x20] sm:$0x3f]
  %388 = vset.pattern.permute.xlu0 0
  %389 = vperm.xlu0 %388, %v382
  %v390 = vpop.permute.xlu0 %389
  %393 = vset.pattern.permute.xlu0 0
  %394 = vperm.xlu0 %393, %v383
  %v395 = vpop.permute.xlu0 %394
  %398 = vset.pattern.permute.xlu0 0
  %399 = vperm.xlu0 %398, %v384
  %v400 = vpop.permute.xlu0 %399
  %403 = vset.pattern.permute.xlu0 0
  %404 = vperm.xlu0 %403, %v385
  %v405 = vpop.permute.xlu0 %404
  %408 = vset.pattern.permute.xlu0 0
  %409 = vperm.xlu0 %408, %v386
  %v410 = vpop.permute.xlu0 %409
  %v412 = vmul.f32 %v377, %v390
  %v413 = vmul.f32 %v378, %v395
  %v414 = vmul.f32 %v379, %v400
  %v415 = vmul.f32 %v380, %v405
  %v416 = vmul.f32 %v381, %v410
  %v417 = vsel %vm52, %v412, 0.0
  %v418 = vsel %vm52, %v413, 0.0
  %v419 = vadd.f32 %v417, %v418
  %v420 = vsel %vm52, %v414, 0.0
  %v421 = vadd.f32 %v419, %v420
  %v422 = vsel %vm52, %v415, 0.0
  %v423 = vadd.f32 %v421, %v422
  %vm424 = vcmask 62464
  %v425 = vsel %vm424, %v416, 0.0
  %v426 = vadd.f32 %v423, %v425
  %v427 = vrot.slane %v426, 4
  %v428 = vadd.f32 %v426, %v427
  %v429 = vrot.slane %v428, 2
  %v430 = vadd.f32 %v428, %v429
  %v431 = vrot.slane %v430, 1
  %v432 = vadd.f32 %v430, %v431
  %v433 = vmul.f32 %v412, %v377
  %v434 = vmul.f32 %v413, %v378
  %v435 = vmul.f32 %v414, %v379
  %v436 = vmul.f32 %v415, %v380
  %v437 = vmul.f32 %v416, %v381
  %v438 = vsel %vm52, %v433, 0.0
  %v439 = vsel %vm52, %v434, 0.0
  %v440 = vadd.f32 %v438, %v439
  %v441 = vsel %vm52, %v435, 0.0
  %v442 = vadd.f32 %v440, %v441
  %v443 = vsel %vm52, %v436, 0.0
  %v444 = vadd.f32 %v442, %v443
  %v445 = vsel %vm424, %v437, 0.0
  %v446 = vadd.f32 %v444, %v445
  %v447 = vrot.slane %v446, 4
  %v448 = vadd.f32 %v446, %v447
  %v449 = vrot.slane %v448, 2
  %v450 = vadd.f32 %v448, %v449
  %v451 = vrot.slane %v450, 1
  %v452 = vadd.f32 %v450, %v451
  %v453 = vmul.f32 %v432, 0.027777778
  %v454 = vmul.f32 %v452, 0.027777778
  %v455 = vmul.f32 %v453, %v453
  %v456 = vsub.f32 %v454, %v455
  %v457 = vmax.f32 %v456, 0.0
  %v458 = vld [vmem:[%s3] sm:$0x1]
  %v459 = vadd.f32 %v457, 1e-05
  %v460 = vrsqrt.pop %v459
  %v461 = vmul.f32 %v458, %v460
  %v462 = vld [vmem:[%s4] sm:$0x1]
  %v463 = vmul.f32 %v453, %v461
  %v464 = vsub.f32 %v462, %v463
  %v466 = vlaneseq
  %v467 = vshrl.u32 %v466, 7
  %v468 = vsub.s32 0, %v467
  %v469 = vrot.slane %v461, %v468
  %v471 = vmul.f32 %v377, %v469
  %v472 = vmul.f32 %v378, %v469
  %v473 = vmul.f32 %v379, %v469
  %v474 = vmul.f32 %v380, %v469
  %v475 = vmul.f32 %v381, %v469
  %v477 = vlaneseq
  %v478 = vshrl.u32 %v477, 7
  %v479 = vsub.s32 0, %v478
  %v480 = vrot.slane %v464, %v479
  %v482 = vadd.f32 %v471, %v480
  %v483 = vadd.f32 %v472, %v480
  %v484 = vadd.f32 %v473, %v480
  %v485 = vadd.f32 %v474, %v480
  %v486 = vadd.f32 %v475, %v480
  %vm487 = vcmp.gt.f32.partialorder %v482, 0.0
  %vm488 = vcmp.gt.f32.partialorder %v483, 0.0
  %vm489 = vcmp.gt.f32.partialorder %v484, 0.0
  %vm490 = vcmp.gt.f32.partialorder %v485, 0.0
  %vm491 = vcmp.gt.f32.partialorder %v486, 0.0
  %v492 = vmin.f32 %v482, 0.0
  %v493 = vmin.f32 %v483, 0.0
  %v494 = vmin.f32 %v484, 0.0
  %v495 = vmin.f32 %v485, 0.0
  %v496 = vmin.f32 %v486, 0.0
  %v497 = vmul.f32 %v492, 1.442695
  %v498 = vpow.pop %v497
  %v499 = vmul.f32 %v493, 1.442695
  %v500 = vpow.pop %v499
  %v501 = vmul.f32 %v494, 1.442695
  %v502 = vpow.pop %v501
  %v503 = vmul.f32 %v495, 1.442695
  %v504 = vpow.pop %v503
  %v505 = vmul.f32 %v496, 1.442695
  %v506 = vpow.pop %v505
  %v507 = vsub.f32 %v498, 1.0
  %v508 = vsub.f32 %v500, 1.0
  %v509 = vsub.f32 %v502, 1.0
  %v510 = vsub.f32 %v504, 1.0
  %v511 = vsub.f32 %v506, 1.0
  %v512 = vsel %vm487, %v482, %v507
  %v513 = vsel %vm488, %v483, %v508
  %v514 = vsel %vm489, %v484, %v509
  %v515 = vsel %vm490, %v485, %v510
  %v516 = vsel %vm491, %v486, %v511
  %v517 = vld [vmem:[%s6] sm:$0xff]
  %v518 = vld [vmem:[%s6 + $0x8] sm:$0xff]
  %v519 = vld [vmem:[%s6 + $0x10] sm:$0xf]
  %vm520 = vcmask 310272
  %v522 = vsel %vm520, %v517, 0
  %v525 = vsel %vm520, %v518, 0
  %v528 = vsel %vm520, %v519, 0
  %v531 = vsel %vm255, %v516, 0
  %533 = vmatprep.subr.mxu0 0.0
  %534 = vmatpush1.msra.mxu0 %v512
  %535 = vmatprep.subr.mxu0 0.0
  %536 = vmatpush1.msra.mxu0 %v513
  %537 = vmatprep.subr.mxu0 0.0
  %538 = vmatpush1.msra.mxu0 %v514
  %539 = vmatprep.subr.mxu0 0.0
  %540 = vmatpush1.msra.mxu0 %v515
  %541 = vmatprep.subr.mxu0 0.0
  %542 = vmatpush1.msra.mxu0 %v531
  %543 = vmatprep.subr.mxu0 0.0
  %544 = vmatpush1.msra.mxu0 0.0
  %545 = vmatprep.subr.mxu0 0.0
  %546 = vmatpush1.msra.mxu0 0.0
  %547 = vmatprep.subr.mxu0 0.0
  %548 = vmatpush1.msra.mxu0 0.0
  %549 = vmatprep.subr.mxu0 0.0
  %550 = vmatpush1.msra.mxu0 0.0
  %551 = vmatprep.subr.mxu0 0.0
  %552 = vmatpush1.msra.mxu0 0.0
  %553 = vmatprep.subr.mxu0 0.0
  %554 = vmatpush1.msra.mxu0 0.0
  %555 = vmatprep.subr.mxu0 0.0
  %556 = vmatpush1.msra.mxu0 0.0
  %557 = vmatprep.subr.mxu0 0.0
  %558 = vmatpush1.msra.mxu0 0.0
  %559 = vmatprep.subr.mxu0 0.0
  %560 = vmatpush1.msra.mxu0 0.0
  %561 = vmatprep.subr.mxu0 0.0
  %562 = vmatpush1.msra.mxu0 0.0
  %563 = vmatprep.subr.mxu0 0.0
  %564 = vmatpush1.msra.mxu0 0.0
  %565 = vmatprep.subr.mxu0 0.0
  %566 = vmatpush1.msra.mxu0 0.0
  %567 = vmatprep.subr.mxu0 0.0
  %568 = vmatpush1.msra.mxu0 0.0
  %569 = vmatprep.subr.mxu0 0.0
  %570 = vmatpush1.msra.mxu0 0.0
  %571 = vmatprep.subr.mxu0 0.0
  %572 = vmatpush1.msra.mxu0 0.0
  %573 = vmatprep.subr.mxu0 0.0
  %574 = vmatpush1.msra.mxu0 0.0
  %575 = vmatprep.subr.mxu0 0.0
  %576 = vmatpush1.msra.mxu0 0.0
  %577 = vmatprep.subr.mxu0 0.0
  %578 = vmatpush1.msra.mxu0 0.0
  %579 = vmatprep.subr.mxu0 0.0
  %580 = vmatpush1.msra.mxu0 0.0
  %581 = vmatprep.subr.mxu0 0.0
  %582 = vmatpush1.msra.mxu0 0.0
  %583 = vmatprep.subr.mxu0 0.0
  %584 = vmatpush1.msra.mxu0 0.0
  %585 = vmatprep.subr.mxu0 0.0
  %586 = vmatpush1.msra.mxu0 0.0
  %587 = vmatprep.subr.mxu0 0.0
  %588 = vmatpush1.msra.mxu0 0.0
  %589 = vmatprep.subr.mxu0 0.0
  %590 = vmatpush1.msra.mxu0 0.0
  %591 = vmatprep.subr.mxu0 0.0
  %592 = vmatpush1.msra.mxu0 0.0
  %593 = vmatprep.subr.mxu0 0.0
  %594 = vmatpush1.msra.mxu0 0.0
  %595 = vmatprep.subr.mxu0 0.0
  %596 = vmatpush1.msra.mxu0 0.0
  %597 = vmatprep.mubr.f32.mxu0 0.0
  %598 = vmatmul.mubr.f32.gmra.mrb[0].mxu0 %v522
  %v599 = vpop.f32.mrb[0].mxu0
  %v600 = vadd.f32 0.0, %v599
  %v601 = vpop.f32.mrb[0].mxu0
  %602 = vmatprep.mubr.f32.mxu0 0.0
  %603 = vmatmul.mubr.f32.gmra.mrb[0].mxu0 %v525
  %v604 = vpop.f32.mrb[0].mxu0
  %v605 = vadd.f32 0.0, %v604
  %v606 = vpop.f32.mrb[0].mxu0
  %607 = vmatprep.mubr.f32.mxu0 0.0
  %608 = vmatmul.mubr.f32.gmra.mrb[0].mxu0 %v528
  %v609 = vpop.f32.mrb[0].mxu0
  %v610 = vadd.f32 0.0, %v609
  %v611 = vpop.f32.mrb[0].mxu0
  %612 = vdwg.mxu0
  %v613 = vld [vmem:[%s7] sm:$0xff]
  %v614 = vld [vmem:[%s7 + $0x8] sm:$0xff]
  %v615 = vld [vmem:[%s7 + $0x10] sm:$0xf]
  %v617 = vsel %vm520, %v613, 0
  %v620 = vsel %vm520, %v614, 0
  %v623 = vsel %vm520, %v615, 0
  %625 = vmatprep.subr.mxu0 0.0
  %626 = vmatpush1.msra.mxu0 %v512
  %627 = vmatprep.subr.mxu0 0.0
  %628 = vmatpush1.msra.mxu0 %v513
  %629 = vmatprep.subr.mxu0 0.0
  %630 = vmatpush1.msra.mxu0 %v514
  %631 = vmatprep.subr.mxu0 0.0
  %632 = vmatpush1.msra.mxu0 %v515
  %633 = vmatprep.subr.mxu0 0.0
  %634 = vmatpush1.msra.mxu0 %v531
  %635 = vmatprep.subr.mxu0 0.0
  %636 = vmatpush1.msra.mxu0 0.0
  %637 = vmatprep.subr.mxu0 0.0
  %638 = vmatpush1.msra.mxu0 0.0
  %639 = vmatprep.subr.mxu0 0.0
  %640 = vmatpush1.msra.mxu0 0.0
  %641 = vmatprep.subr.mxu0 0.0
  %642 = vmatpush1.msra.mxu0 0.0
  %643 = vmatprep.subr.mxu0 0.0
  %644 = vmatpush1.msra.mxu0 0.0
  %645 = vmatprep.subr.mxu0 0.0
  %646 = vmatpush1.msra.mxu0 0.0
  %647 = vmatprep.subr.mxu0 0.0
  %648 = vmatpush1.msra.mxu0 0.0
  %649 = vmatprep.subr.mxu0 0.0
  %650 = vmatpush1.msra.mxu0 0.0
  %651 = vmatprep.subr.mxu0 0.0
  %652 = vmatpush1.msra.mxu0 0.0
  %653 = vmatprep.subr.mxu0 0.0
  %654 = vmatpush1.msra.mxu0 0.0
  %655 = vmatprep.subr.mxu0 0.0
  %656 = vmatpush1.msra.mxu0 0.0
  %657 = vmatprep.subr.mxu0 0.0
  %658 = vmatpush1.msra.mxu0 0.0
  %659 = vmatprep.subr.mxu0 0.0
  %660 = vmatpush1.msra.mxu0 0.0
  %661 = vmatprep.subr.mxu0 0.0
  %662 = vmatpush1.msra.mxu0 0.0
  %663 = vmatprep.subr.mxu0 0.0
  %664 = vmatpush1.msra.mxu0 0.0
  %665 = vmatprep.subr.mxu0 0.0
  %666 = vmatpush1.msra.mxu0 0.0
  %667 = vmatprep.subr.mxu0 0.0
  %668 = vmatpush1.msra.mxu0 0.0
  %669 = vmatprep.subr.mxu0 0.0
  %670 = vmatpush1.msra.mxu0 0.0
  %671 = vmatprep.subr.mxu0 0.0
  %672 = vmatpush1.msra.mxu0 0.0
  %673 = vmatprep.subr.mxu0 0.0
  %674 = vmatpush1.msra.mxu0 0.0
  %675 = vmatprep.subr.mxu0 0.0
  %676 = vmatpush1.msra.mxu0 0.0
  %677 = vmatprep.subr.mxu0 0.0
  %678 = vmatpush1.msra.mxu0 0.0
  %679 = vmatprep.subr.mxu0 0.0
  %680 = vmatpush1.msra.mxu0 0.0
  %681 = vmatprep.subr.mxu0 0.0
  %682 = vmatpush1.msra.mxu0 0.0
  %683 = vmatprep.subr.mxu0 0.0
  %684 = vmatpush1.msra.mxu0 0.0
  %685 = vmatprep.subr.mxu0 0.0
  %686 = vmatpush1.msra.mxu0 0.0
  %687 = vmatprep.subr.mxu0 0.0
  %688 = vmatpush1.msra.mxu0 0.0
  %689 = vmatprep.mubr.f32.mxu0 0.0
  %690 = vmatmul.mubr.f32.gmra.mrb[0].mxu0 %v617
  %v691 = vpop.f32.mrb[0].mxu0
  %v692 = vadd.f32 0.0, %v691
  %v693 = vpop.f32.mrb[0].mxu0
  %694 = vmatprep.mubr.f32.mxu0 0.0
  %695 = vmatmul.mubr.f32.gmra.mrb[0].mxu0 %v620
  %v696 = vpop.f32.mrb[0].mxu0
  %v697 = vadd.f32 0.0, %v696
  %v698 = vpop.f32.mrb[0].mxu0
  %699 = vmatprep.mubr.f32.mxu0 0.0
  %700 = vmatmul.mubr.f32.gmra.mrb[0].mxu0 %v623
  %v701 = vpop.f32.mrb[0].mxu0
  %v702 = vadd.f32 0.0, %v701
  %v703 = vpop.f32.mrb[0].mxu0
  %704 = vdwg.mxu0
  %v705 = vmax.f32 %v600, %v692
  %v706 = vmax.f32 %v605, %v697
  %v707 = vmax.f32 %v610, %v702
  %708 = vst.msk [vmem:[%s8] sm:$0xff] %vm52, %v705
  %709 = vst.msk [vmem:[%s8 + $0x8] sm:$0xff] %vm52, %v706
  %vm710 = vcmask 60416
  %711 = vst.msk [vmem:[%s8 + $0x10] sm:$0xf] %vm710, %v707
  // Predicated region
  $region34: #{convlayer_forward.1} parent=0 // pred_check
    _
  $region35: #{convlayer_forward.1} parent=0 // pred_check_branch
    %713 = sbr.rel (0) target = $region37
  $region36: #{convlayer_forward.1} parent=0 // pred_region
    _
  $region37: #{convlayer_forward.1} parent=0 // pred_fallthru
    _
  // Predicated region
  $region38: #{convlayer_forward.1} parent=0 // pred_check
    _
  $region39: #{convlayer_forward.1} parent=0 // pred_check_branch
    %715 = sbr.rel (0) target = $region41
  $region40: #{convlayer_forward.1} parent=0 // pred_region
    _
  $region41: #{convlayer_forward.1} parent=0 // pred_fallthru
    _

</llo_original>
